<compile_context>
chip_gen: v5e
topology: v5e:2x2
jax: 0.10.0
libtpu: 0.0.40
codegen_flags: <defaults>
</compile_context>

<pallas_src>
import functools
import math

import jax
import jax.numpy as jnp
from jax.experimental import pallas as pl
from jax.experimental.pallas import tpu as pltpu

FEATURE_DIM = 8
TOKEN_DIM = 128
TOKEN_NUM = 16
HEADS = 8
DIM_HEAD = 64
INNER_DIM = HEADS * DIM_HEAD  # 512
SCALE = DIM_HEAD ** (-0.5)

_HI = jax.lax.Precision.HIGHEST


def _policy_stem_kernel(x_ref, a_ref, wvo_ref, bo_ref, o_ref, *, n, tb):
    """One grid step processes tb batch elements.

    x_ref  : [tb*n, F]      flattened input features (row block)
    a_ref  : [F, 128]       fused, pre-scaled score projection ((W_fe.W_k)_h . q_h^T)
    wvo_ref: [H, F, 128]    fused value->output projection (W_fe.W_v)_h . W_out_h
    bo_ref : [1, 128]       fused output bias  b_out + (b_fe.W_v).W_out
    o_ref  : [tb*16, 128]   latent tokens (row block, lane dense)
    """
    x = x_ref[...]                                                     # [tb*n, F]

    # --- attention logits for all heads: ONE lane-dense MXU op, lanes = (h, i)
    s = jnp.dot(x, a_ref[...], preferred_element_type=jnp.float32)     # [tb*n, 128]
    s = s.reshape(tb, n, HEADS * TOKEN_NUM)

    # --- softmax over the context axis j (axis=1), independently per (h, i) lane
    s = s - jnp.max(s, axis=1, keepdims=True)
    p = jnp.exp(s)
    p = p * pl.reciprocal(jnp.sum(p, axis=1, keepdims=True), approx=False)

    use_regs = tb * TOKEN_NUM <= 128        # accumulator fits in <= 16 vregs
    if use_regs:
        acc = jnp.zeros((tb * TOKEN_NUM, TOKEN_DIM), jnp.float32)
    else:
        o_ref[...] = jnp.broadcast_to(bo_ref[...], (tb * TOKEN_NUM, TOKEN_DIM))

    for h in range(HEADS):                                             # static unroll
        # fused feature_extractor . to_v . to_out projection, head on leading axis
        vp = jnp.dot(x, wvo_ref[h], preferred_element_type=jnp.float32)   # [tb*n,128]
        vp = vp.reshape(tb, n, TOKEN_DIM)
        # per-head attention probs, brought to [tb, 16, n] for a plain NN matmul
        p_h = jnp.swapaxes(p[:, :, h * TOKEN_NUM:(h + 1) * TOKEN_NUM], 1, 2)
        out_h = jnp.einsum('bij,bjc->bic', p_h, vp,
                           preferred_element_type=jnp.float32)         # [tb,16,128]
        out_h = out_h.reshape(tb * TOKEN_NUM, TOKEN_DIM)
        if use_regs:
            acc = acc + out_h
        else:
            o_ref[...] += out_h

    if use_regs:
        o_ref[...] = (acc + bo_ref[...]).astype(o_ref.dtype)


@functools.partial(jax.jit, static_argnames=("block_b",))
def policy_stem_forward(x, tokens, w_fe, b_fe, w_q, w_kv, w_out, b_out,
                        *, block_b=32):
    """PolicyStem.forward.  x: [B, T, ..., F] float32 -> [B, 16, 128]."""
    B = x.shape[0]
    assert x.shape[-1] == FEATURE_DIM
    x3 = x.reshape(B, -1, FEATURE_DIM)            # compute_latent's flatten
    N = x3.shape[1]
    x_flat = x3.reshape(B * N, FEATURE_DIM)

    # ---- batch-independent algebraic fusion (done once, HIGHEST precision) ----
    w_k, w_v = w_kv[:, :INNER_DIM], w_kv[:, INNER_DIM:]
    wk_fe = jnp.dot(w_fe, w_k, precision=_HI)                          # [F, 512]
    wv_fe = jnp.dot(w_fe, w_v, precision=_HI)                          # [F, 512]
    q = jnp.dot(tokens.reshape(TOKEN_NUM, TOKEN_DIM), w_q, precision=_HI)  # [16, 512]

    # A[f, h*16+i] = SCALE * sum_d (W_fe.W_k)[f, h*64+d] * q[i, h*64+d]
    a_mat = SCALE * jnp.einsum(
        'fhd,ihd->fhi',
        wk_fe.reshape(FEATURE_DIM, HEADS, DIM_HEAD),
        q.reshape(TOKEN_NUM, HEADS, DIM_HEAD), precision=_HI)
    a_mat = a_mat.reshape(FEATURE_DIM, HEADS * TOKEN_NUM)              # [8, 128]

    # Wvo[h, f, c] = sum_d (W_fe.W_v)[f, h*64+d] * W_out[h*64+d, c]
    wvo = jnp.einsum(
        'fhd,hdc->hfc',
        wv_fe.reshape(FEATURE_DIM, HEADS, DIM_HEAD),
        w_out.reshape(HEADS, DIM_HEAD, TOKEN_DIM), precision=_HI)      # [H, 8, 128]

    # value-path bias (softmax rows sum to 1) + to_out bias
    bo = b_out + jnp.dot(jnp.dot(b_fe, w_v, precision=_HI), w_out, precision=_HI)
    bo2 = bo.reshape(1, TOKEN_DIM)

    # ---- batch blocking: big blocks for MXU fill, but always >= 2 grid steps
    #      (v7x megacore) when B >= 2; tb*N kept a multiple of 8 for row tiling.
    tb = max(1, min(block_b, (B + 1) // 2))
    unit = 8 // math.gcd(N, 8)                 # smallest tb with (tb*N) % 8 == 0
    tb = ((tb + unit - 1) // unit) * unit
    nb = pl.cdiv(B, tb)
    b_pad = nb * tb
    if b_pad != B:
        x_flat = jnp.pad(x_flat, ((0, (b_pad - B) * N), (0, 0)))

    kernel = functools.partial(_policy_stem_kernel, n=N, tb=tb)
    grid_spec = pltpu.PrefetchScalarGridSpec(
        num_scalar_prefetch=0,
        grid=(nb,),
        in_specs=[
            pl.BlockSpec((tb * N, FEATURE_DIM), lambda b: (b, 0)),             # x rows
            pl.BlockSpec((FEATURE_DIM, HEADS * TOKEN_NUM), lambda b: (0, 0)),  # A
            pl.BlockSpec((HEADS, FEATURE_DIM, TOKEN_DIM), lambda b: (0, 0, 0)),  # Wvo
            pl.BlockSpec((1, TOKEN_DIM), lambda b: (0, 0)),                    # bo
        ],
        out_specs=pl.BlockSpec((tb * TOKEN_NUM, TOKEN_DIM), lambda b: (b, 0)),
    )

    out = pl.pallas_call(
        kernel,
        out_shape=jax.ShapeDtypeStruct((b_pad * TOKEN_NUM, TOKEN_DIM), jnp.float32),
        grid_spec=grid_spec,
        compiler_params=pltpu.CompilerParams(
            dimension_semantics=("parallel",)),
    )(x_flat, a_mat, wvo, bo2)
    return out.reshape(b_pad, TOKEN_NUM, TOKEN_DIM)[:B]


def _reference(x, tokens, w_fe, b_fe, w_q, w_kv, w_out, b_out):
    """Pure-JAX reference of PolicyStem.forward (eval mode)."""
    B = x.shape[0]
    x3 = x.reshape(B, -1, FEATURE_DIM)
    feat = jnp.dot(x3, w_fe, precision=_HI) + b_fe                     # [B, N, 128]
    tok = jnp.broadcast_to(tokens.reshape(1, TOKEN_NUM, TOKEN_DIM),
                           (B, TOKEN_NUM, TOKEN_DIM))
    q = jnp.dot(tok, w_q, precision=_HI)                               # [B, 16, 512]
    kv = jnp.dot(feat, w_kv, precision=_HI)                            # [B, N, 1024]
    k, v = kv[..., :INNER_DIM], kv[..., INNER_DIM:]

    def split_heads(t):
        b, n, _ = t.shape
        return t.reshape(b, n, HEADS, DIM_HEAD).transpose(0, 2, 1, 3)

    qh, kh, vh = split_heads(q), split_heads(k), split_heads(v)
    sim = jnp.einsum('bhid,bhjd->bhij', qh, kh, precision=_HI) * SCALE
    attn = jax.nn.softmax(sim, axis=-1)
    out = jnp.einsum('bhij,bhjd->bhid', attn, vh, precision=_HI)       # [B, h, 16, 64]
    out = out.transpose(0, 2, 1, 3).reshape(B, TOKEN_NUM, INNER_DIM)
    return jnp.dot(out, w_out, precision=_HI) + b_out


if __name__ == "__main__":
    key = jax.random.PRNGKey(0)
    ks = jax.random.split(key, 8)

    # x: [B, T, S, F] like the PyTorch module ([B, T, ..., F]); N = T*S = 8.
    B, T, S = 2, 2, 4
    x = jax.random.normal(ks[0], (B, T, S, FEATURE_DIM), dtype=jnp.float32)

    INIT_CONST = 0.02
    tokens = jax.random.normal(ks[1], (TOKEN_NUM, TOKEN_DIM), jnp.float32) * INIT_CONST
    w_fe = jax.random.normal(ks[2], (FEATURE_DIM, TOKEN_DIM), jnp.float32) * 0.05
    b_fe = jax.random.normal(ks[3], (TOKEN_DIM,), jnp.float32) * 0.05
    w_q = jax.random.normal(ks[4], (TOKEN_DIM, INNER_DIM), jnp.float32) * 0.05
    w_kv = jax.random.normal(ks[5], (TOKEN_DIM, 2 * INNER_DIM), jnp.float32) * 0.05
    w_out = jax.random.normal(ks[6], (INNER_DIM, TOKEN_DIM), jnp.float32) * 0.05
    b_out = jax.random.normal(ks[7], (TOKEN_DIM,), jnp.float32) * 0.05

    out = policy_stem_forward(x, tokens, w_fe, b_fe, w_q, w_kv, w_out, b_out)
    out = jax.block_until_ready(out)

    ref = _reference(x, tokens, w_fe, b_fe, w_q, w_kv, w_out, b_out)
    assert out.shape == (B, TOKEN_NUM, TOKEN_DIM)
    assert jnp.allclose(out, ref, atol=1e-4, rtol=1e-4), "mismatch vs pure-JAX reference"

    print("KERNEL_OK")
</pallas_src>

<mosaic_0001>
module attributes {stable_mosaic.version = 11 : i64} {
  func.func @_policy_stem_kernel(%arg0: i32, %arg1: memref<8x8xf32, #tpu.memory_space<vmem>>, %arg2: memref<8x128xf32, #tpu.memory_space<vmem>>, %arg3: memref<8x8x128xf32, #tpu.memory_space<vmem>>, %arg4: memref<1x128xf32, #tpu.memory_space<vmem>>, %arg5: memref<16x128xf32, #tpu.memory_space<vmem>>) attributes {dimension_semantics = [#tpu.dimension_semantics<parallel>], iteration_bounds = array<i64: 2>, scalar_prefetch = 0 : i64, scratch_operands = 0 : i64, tpu.core_type = #tpu.core_type<tc>, window_params = [{transform_indices = @transform_0, window_bounds = array<i64: 8, 8>}, {pipeline_mode = #tpu.pipeline_mode<synchronous>, transform_indices = @transform_1, window_bounds = array<i64: 8, 128>}, {pipeline_mode = #tpu.pipeline_mode<synchronous>, transform_indices = @transform_2, window_bounds = array<i64: 8, 8, 128>}, {pipeline_mode = #tpu.pipeline_mode<synchronous>, transform_indices = @transform_3, window_bounds = array<i64: 1, 128>}, {transform_indices = @transform_4, window_bounds = array<i64: 16, 128>}]} {
    %c0 = arith.constant 0 : index
    %c0_0 = arith.constant 0 : index
    %0 = vector.load %arg1[%c0, %c0_0] : memref<8x8xf32, #tpu.memory_space<vmem>>, vector<8x8xf32>
    %c0_1 = arith.constant 0 : index
    %c0_2 = arith.constant 0 : index
    %1 = vector.load %arg2[%c0_1, %c0_2] : memref<8x128xf32, #tpu.memory_space<vmem>>, vector<8x128xf32>
    %cst = arith.constant dense<0.000000e+00> : vector<8x128xf32>
    %2 = tpu.matmul %0, %1, %cst {dimension_numbers = #tpu.dot_dimension_numbers<[1], [0], [0], [1], [0, 0, 1, 1], [], []>} : vector<8x8xf32>, vector<8x128xf32>, vector<8x128xf32> -> vector<8x128xf32>
    %3 = vector.shape_cast %2 : vector<8x128xf32> to vector<1x8x128xf32>
    %cst_3 = arith.constant dense<0xFF800000> : vector<1x128xf32>
    %4 = vector.multi_reduction <maximumf>, %3, %cst_3 [1] : vector<1x8x128xf32> to vector<1x128xf32>
    %5 = vector.shape_cast %4 : vector<1x128xf32> to vector<1x1x128xf32>
    %6 = vector.broadcast %5 : vector<1x1x128xf32> to vector<1x8x128xf32>
    %7 = arith.subf %3, %6 : vector<1x8x128xf32>
    %8 = math.exp %7 : vector<1x8x128xf32>
    %cst_4 = arith.constant dense<0.000000e+00> : vector<1x128xf32>
    %9 = vector.multi_reduction <add>, %8, %cst_4 [1] : vector<1x8x128xf32> to vector<1x128xf32>
    %10 = vector.shape_cast %9 : vector<1x128xf32> to vector<1x1x128xf32>
    %11 = tpu.reciprocal %10 : vector<1x1x128xf32> -> vector<1x1x128xf32>
    %12 = vector.broadcast %11 : vector<1x1x128xf32> to vector<1x8x128xf32>
    %13 = arith.mulf %8, %12 : vector<1x8x128xf32>
    %cst_5 = arith.constant 0.000000e+00 : f32
    %14 = vector.broadcast %cst_5 : f32 to vector<16x128xf32>
    %c0_6 = arith.constant 0 : index
    %c0_7 = arith.constant 0 : index
    %c0_8 = arith.constant 0 : index
    %15 = vector.load %arg3[%c0_6, %c0_7, %c0_8] : memref<8x8x128xf32, #tpu.memory_space<vmem>>, vector<1x8x128xf32>
    %16 = vector.shape_cast %15 : vector<1x8x128xf32> to vector<8x128xf32>
    %cst_9 = arith.constant dense<0.000000e+00> : vector<8x128xf32>
    %17 = tpu.matmul %0, %16, %cst_9 {dimension_numbers = #tpu.dot_dimension_numbers<[1], [0], [0], [1], [0, 0, 1, 1], [], []>} : vector<8x8xf32>, vector<8x128xf32>, vector<8x128xf32> -> vector<8x128xf32>
    %18 = vector.shape_cast %17 : vector<8x128xf32> to vector<1x8x128xf32>
    %19 = vector.extract_strided_slice %13 {offsets = [0, 0, 0], sizes = [1, 8, 16], strides = [1, 1, 1]} : vector<1x8x128xf32> to vector<1x8x16xf32>
    %20 = tpu.transpose %19, [0, 2, 1] : vector<1x8x16xf32> -> vector<1x16x8xf32>
    "tpu.trace_start"() <{level = 10 : i32, message = "bij,bjc->bic"}> : () -> ()
    %cst_10 = arith.constant dense<0.000000e+00> : vector<1x16x128xf32>
    %21 = tpu.matmul %20, %18, %cst_10 {dimension_numbers = #tpu.dot_dimension_numbers<[2], [1], [1], [2], [0, 0, 0, 1, 1, 2], [0], [0]>} : vector<1x16x8xf32>, vector<1x8x128xf32>, vector<1x16x128xf32> -> vector<1x16x128xf32>
    "tpu.trace_stop"() : () -> ()
    %22 = vector.shape_cast %21 : vector<1x16x128xf32> to vector<16x128xf32>
    %23 = arith.addf %14, %22 : vector<16x128xf32>
    %c1 = arith.constant 1 : index
    %c0_11 = arith.constant 0 : index
    %c0_12 = arith.constant 0 : index
    %24 = vector.load %arg3[%c1, %c0_11, %c0_12] : memref<8x8x128xf32, #tpu.memory_space<vmem>>, vector<1x8x128xf32>
    %25 = vector.shape_cast %24 : vector<1x8x128xf32> to vector<8x128xf32>
    %cst_13 = arith.constant dense<0.000000e+00> : vector<8x128xf32>
    %26 = tpu.matmul %0, %25, %cst_13 {dimension_numbers = #tpu.dot_dimension_numbers<[1], [0], [0], [1], [0, 0, 1, 1], [], []>} : vector<8x8xf32>, vector<8x128xf32>, vector<8x128xf32> -> vector<8x128xf32>
    %27 = vector.shape_cast %26 : vector<8x128xf32> to vector<1x8x128xf32>
    %28 = vector.extract_strided_slice %13 {offsets = [0, 0, 16], sizes = [1, 8, 16], strides = [1, 1, 1]} : vector<1x8x128xf32> to vector<1x8x16xf32>
    %29 = tpu.transpose %28, [0, 2, 1] : vector<1x8x16xf32> -> vector<1x16x8xf32>
    "tpu.trace_start"() <{level = 10 : i32, message = "bij,bjc->bic"}> : () -> ()
    %cst_14 = arith.constant dense<0.000000e+00> : vector<1x16x128xf32>
    %30 = tpu.matmul %29, %27, %cst_14 {dimension_numbers = #tpu.dot_dimension_numbers<[2], [1], [1], [2], [0, 0, 0, 1, 1, 2], [0], [0]>} : vector<1x16x8xf32>, vector<1x8x128xf32>, vector<1x16x128xf32> -> vector<1x16x128xf32>
    "tpu.trace_stop"() : () -> ()
    %31 = vector.shape_cast %30 : vector<1x16x128xf32> to vector<16x128xf32>
    %32 = arith.addf %23, %31 : vector<16x128xf32>
    %c2 = arith.constant 2 : index
    %c0_15 = arith.constant 0 : index
    %c0_16 = arith.constant 0 : index
    %33 = vector.load %arg3[%c2, %c0_15, %c0_16] : memref<8x8x128xf32, #tpu.memory_space<vmem>>, vector<1x8x128xf32>
    %34 = vector.shape_cast %33 : vector<1x8x128xf32> to vector<8x128xf32>
    %cst_17 = arith.constant dense<0.000000e+00> : vector<8x128xf32>
    %35 = tpu.matmul %0, %34, %cst_17 {dimension_numbers = #tpu.dot_dimension_numbers<[1], [0], [0], [1], [0, 0, 1, 1], [], []>} : vector<8x8xf32>, vector<8x128xf32>, vector<8x128xf32> -> vector<8x128xf32>
    %36 = vector.shape_cast %35 : vector<8x128xf32> to vector<1x8x128xf32>
    %37 = vector.extract_strided_slice %13 {offsets = [0, 0, 32], sizes = [1, 8, 16], strides = [1, 1, 1]} : vector<1x8x128xf32> to vector<1x8x16xf32>
    %38 = tpu.transpose %37, [0, 2, 1] : vector<1x8x16xf32> -> vector<1x16x8xf32>
    "tpu.trace_start"() <{level = 10 : i32, message = "bij,bjc->bic"}> : () -> ()
    %cst_18 = arith.constant dense<0.000000e+00> : vector<1x16x128xf32>
    %39 = tpu.matmul %38, %36, %cst_18 {dimension_numbers = #tpu.dot_dimension_numbers<[2], [1], [1], [2], [0, 0, 0, 1, 1, 2], [0], [0]>} : vector<1x16x8xf32>, vector<1x8x128xf32>, vector<1x16x128xf32> -> vector<1x16x128xf32>
    "tpu.trace_stop"() : () -> ()
    %40 = vector.shape_cast %39 : vector<1x16x128xf32> to vector<16x128xf32>
    %41 = arith.addf %32, %40 : vector<16x128xf32>
    %c3 = arith.constant 3 : index
    %c0_19 = arith.constant 0 : index
    %c0_20 = arith.constant 0 : index
    %42 = vector.load %arg3[%c3, %c0_19, %c0_20] : memref<8x8x128xf32, #tpu.memory_space<vmem>>, vector<1x8x128xf32>
    %43 = vector.shape_cast %42 : vector<1x8x128xf32> to vector<8x128xf32>
    %cst_21 = arith.constant dense<0.000000e+00> : vector<8x128xf32>
    %44 = tpu.matmul %0, %43, %cst_21 {dimension_numbers = #tpu.dot_dimension_numbers<[1], [0], [0], [1], [0, 0, 1, 1], [], []>} : vector<8x8xf32>, vector<8x128xf32>, vector<8x128xf32> -> vector<8x128xf32>
    %45 = vector.shape_cast %44 : vector<8x128xf32> to vector<1x8x128xf32>
    %46 = vector.extract_strided_slice %13 {offsets = [0, 0, 48], sizes = [1, 8, 16], strides = [1, 1, 1]} : vector<1x8x128xf32> to vector<1x8x16xf32>
    %47 = tpu.transpose %46, [0, 2, 1] : vector<1x8x16xf32> -> vector<1x16x8xf32>
    "tpu.trace_start"() <{level = 10 : i32, message = "bij,bjc->bic"}> : () -> ()
    %cst_22 = arith.constant dense<0.000000e+00> : vector<1x16x128xf32>
    %48 = tpu.matmul %47, %45, %cst_22 {dimension_numbers = #tpu.dot_dimension_numbers<[2], [1], [1], [2], [0, 0, 0, 1, 1, 2], [0], [0]>} : vector<1x16x8xf32>, vector<1x8x128xf32>, vector<1x16x128xf32> -> vector<1x16x128xf32>
    "tpu.trace_stop"() : () -> ()
    %49 = vector.shape_cast %48 : vector<1x16x128xf32> to vector<16x128xf32>
    %50 = arith.addf %41, %49 : vector<16x128xf32>
    %c4 = arith.constant 4 : index
    %c0_23 = arith.constant 0 : index
    %c0_24 = arith.constant 0 : index
    %51 = vector.load %arg3[%c4, %c0_23, %c0_24] : memref<8x8x128xf32, #tpu.memory_space<vmem>>, vector<1x8x128xf32>
    %52 = vector.shape_cast %51 : vector<1x8x128xf32> to vector<8x128xf32>
    %cst_25 = arith.constant dense<0.000000e+00> : vector<8x128xf32>
    %53 = tpu.matmul %0, %52, %cst_25 {dimension_numbers = #tpu.dot_dimension_numbers<[1], [0], [0], [1], [0, 0, 1, 1], [], []>} : vector<8x8xf32>, vector<8x128xf32>, vector<8x128xf32> -> vector<8x128xf32>
    %54 = vector.shape_cast %53 : vector<8x128xf32> to vector<1x8x128xf32>
    %55 = vector.extract_strided_slice %13 {offsets = [0, 0, 64], sizes = [1, 8, 16], strides = [1, 1, 1]} : vector<1x8x128xf32> to vector<1x8x16xf32>
    %56 = tpu.transpose %55, [0, 2, 1] : vector<1x8x16xf32> -> vector<1x16x8xf32>
    "tpu.trace_start"() <{level = 10 : i32, message = "bij,bjc->bic"}> : () -> ()
    %cst_26 = arith.constant dense<0.000000e+00> : vector<1x16x128xf32>
    %57 = tpu.matmul %56, %54, %cst_26 {dimension_numbers = #tpu.dot_dimension_numbers<[2], [1], [1], [2], [0, 0, 0, 1, 1, 2], [0], [0]>} : vector<1x16x8xf32>, vector<1x8x128xf32>, vector<1x16x128xf32> -> vector<1x16x128xf32>
    "tpu.trace_stop"() : () -> ()
    %58 = vector.shape_cast %57 : vector<1x16x128xf32> to vector<16x128xf32>
    %59 = arith.addf %50, %58 : vector<16x128xf32>
    %c5 = arith.constant 5 : index
    %c0_27 = arith.constant 0 : index
    %c0_28 = arith.constant 0 : index
    %60 = vector.load %arg3[%c5, %c0_27, %c0_28] : memref<8x8x128xf32, #tpu.memory_space<vmem>>, vector<1x8x128xf32>
    %61 = vector.shape_cast %60 : vector<1x8x128xf32> to vector<8x128xf32>
    %cst_29 = arith.constant dense<0.000000e+00> : vector<8x128xf32>
    %62 = tpu.matmul %0, %61, %cst_29 {dimension_numbers = #tpu.dot_dimension_numbers<[1], [0], [0], [1], [0, 0, 1, 1], [], []>} : vector<8x8xf32>, vector<8x128xf32>, vector<8x128xf32> -> vector<8x128xf32>
    %63 = vector.shape_cast %62 : vector<8x128xf32> to vector<1x8x128xf32>
    %64 = vector.extract_strided_slice %13 {offsets = [0, 0, 80], sizes = [1, 8, 16], strides = [1, 1, 1]} : vector<1x8x128xf32> to vector<1x8x16xf32>
    %65 = tpu.transpose %64, [0, 2, 1] : vector<1x8x16xf32> -> vector<1x16x8xf32>
    "tpu.trace_start"() <{level = 10 : i32, message = "bij,bjc->bic"}> : () -> ()
    %cst_30 = arith.constant dense<0.000000e+00> : vector<1x16x128xf32>
    %66 = tpu.matmul %65, %63, %cst_30 {dimension_numbers = #tpu.dot_dimension_numbers<[2], [1], [1], [2], [0, 0, 0, 1, 1, 2], [0], [0]>} : vector<1x16x8xf32>, vector<1x8x128xf32>, vector<1x16x128xf32> -> vector<1x16x128xf32>
    "tpu.trace_stop"() : () -> ()
    %67 = vector.shape_cast %66 : vector<1x16x128xf32> to vector<16x128xf32>
    %68 = arith.addf %59, %67 : vector<16x128xf32>
    %c6 = arith.constant 6 : index
    %c0_31 = arith.constant 0 : index
    %c0_32 = arith.constant 0 : index
    %69 = vector.load %arg3[%c6, %c0_31, %c0_32] : memref<8x8x128xf32, #tpu.memory_space<vmem>>, vector<1x8x128xf32>
    %70 = vector.shape_cast %69 : vector<1x8x128xf32> to vector<8x128xf32>
    %cst_33 = arith.constant dense<0.000000e+00> : vector<8x128xf32>
    %71 = tpu.matmul %0, %70, %cst_33 {dimension_numbers = #tpu.dot_dimension_numbers<[1], [0], [0], [1], [0, 0, 1, 1], [], []>} : vector<8x8xf32>, vector<8x128xf32>, vector<8x128xf32> -> vector<8x128xf32>
    %72 = vector.shape_cast %71 : vector<8x128xf32> to vector<1x8x128xf32>
    %73 = vector.extract_strided_slice %13 {offsets = [0, 0, 96], sizes = [1, 8, 16], strides = [1, 1, 1]} : vector<1x8x128xf32> to vector<1x8x16xf32>
    %74 = tpu.transpose %73, [0, 2, 1] : vector<1x8x16xf32> -> vector<1x16x8xf32>
    "tpu.trace_start"() <{level = 10 : i32, message = "bij,bjc->bic"}> : () -> ()
    %cst_34 = arith.constant dense<0.000000e+00> : vector<1x16x128xf32>
    %75 = tpu.matmul %74, %72, %cst_34 {dimension_numbers = #tpu.dot_dimension_numbers<[2], [1], [1], [2], [0, 0, 0, 1, 1, 2], [0], [0]>} : vector<1x16x8xf32>, vector<1x8x128xf32>, vector<1x16x128xf32> -> vector<1x16x128xf32>
    "tpu.trace_stop"() : () -> ()
    %76 = vector.shape_cast %75 : vector<1x16x128xf32> to vector<16x128xf32>
    %77 = arith.addf %68, %76 : vector<16x128xf32>
    %c7 = arith.constant 7 : index
    %c0_35 = arith.constant 0 : index
    %c0_36 = arith.constant 0 : index
    %78 = vector.load %arg3[%c7, %c0_35, %c0_36] : memref<8x8x128xf32, #tpu.memory_space<vmem>>, vector<1x8x128xf32>
    %79 = vector.shape_cast %78 : vector<1x8x128xf32> to vector<8x128xf32>
    %cst_37 = arith.constant dense<0.000000e+00> : vector<8x128xf32>
    %80 = tpu.matmul %0, %79, %cst_37 {dimension_numbers = #tpu.dot_dimension_numbers<[1], [0], [0], [1], [0, 0, 1, 1], [], []>} : vector<8x8xf32>, vector<8x128xf32>, vector<8x128xf32> -> vector<8x128xf32>
    %81 = vector.shape_cast %80 : vector<8x128xf32> to vector<1x8x128xf32>
    %82 = vector.extract_strided_slice %13 {offsets = [0, 0, 112], sizes = [1, 8, 16], strides = [1, 1, 1]} : vector<1x8x128xf32> to vector<1x8x16xf32>
    %83 = tpu.transpose %82, [0, 2, 1] : vector<1x8x16xf32> -> vector<1x16x8xf32>
    "tpu.trace_start"() <{level = 10 : i32, message = "bij,bjc->bic"}> : () -> ()
    %cst_38 = arith.constant dense<0.000000e+00> : vector<1x16x128xf32>
    %84 = tpu.matmul %83, %81, %cst_38 {dimension_numbers = #tpu.dot_dimension_numbers<[2], [1], [1], [2], [0, 0, 0, 1, 1, 2], [0], [0]>} : vector<1x16x8xf32>, vector<1x8x128xf32>, vector<1x16x128xf32> -> vector<1x16x128xf32>
    "tpu.trace_stop"() : () -> ()
    %85 = vector.shape_cast %84 : vector<1x16x128xf32> to vector<16x128xf32>
    %86 = arith.addf %77, %85 : vector<16x128xf32>
    %c0_39 = arith.constant 0 : index
    %c0_40 = arith.constant 0 : index
    %87 = vector.load %arg4[%c0_39, %c0_40] : memref<1x128xf32, #tpu.memory_space<vmem>>, vector<1x128xf32>
    %88 = vector.broadcast %87 : vector<1x128xf32> to vector<16x128xf32>
    %89 = arith.addf %86, %88 : vector<16x128xf32>
    %c0_41 = arith.constant 0 : index
    %c0_42 = arith.constant 0 : index
    %90 = vector.load %arg5[%c0_41, %c0_42] : memref<16x128xf32, #tpu.memory_space<vmem>>, vector<16x128xf32>
    tpu.vector_store %arg5[%c0_41, %c0_42], %89 {strides = array<i32>} : memref<16x128xf32, #tpu.memory_space<vmem>>, vector<16x128xf32>,
    return
  }
  func.func @transform_0(%arg0: i32) -> (i32, i32) {
    %c0_i32 = arith.constant 0 : i32
    %c0_i32_0 = arith.constant 0 : i32
    return %arg0, %c0_i32 : i32, i32
  }
  func.func @transform_1(%arg0: i32) -> (i32, i32) {
    %c0_i32 = arith.constant 0 : i32
    %c0_i32_0 = arith.constant 0 : i32
    %c0_i32_1 = arith.constant 0 : i32
    return %c0_i32, %c0_i32_0 : i32, i32
  }
  func.func @transform_2(%arg0: i32) -> (i32, i32, i32) {
    %c0_i32 = arith.constant 0 : i32
    %c0_i32_0 = arith.constant 0 : i32
    %c0_i32_1 = arith.constant 0 : i32
    %c0_i32_2 = arith.constant 0 : i32
    return %c0_i32, %c0_i32_0, %c0_i32_1 : i32, i32, i32
  }
  func.func @transform_3(%arg0: i32) -> (i32, i32) {
    %c0_i32 = arith.constant 0 : i32
    %c0_i32_0 = arith.constant 0 : i32
    %c0_i32_1 = arith.constant 0 : i32
    return %c0_i32, %c0_i32_0 : i32, i32
  }
  func.func @transform_4(%arg0: i32) -> (i32, i32) {
    %c0_i32 = arith.constant 0 : i32
    %c0_i32_0 = arith.constant 0 : i32
    return %arg0, %c0_i32 : i32, i32
  }
}

</mosaic_0001>

<llo_original>
// kernel: policy_stem_forward.1
$region0: #{policy_stem_forward.1}
  #allocation0 [shape = 'u32[]', space=smem, size = 0x4, offset = 0x4, fixed_abs, tag = 'smem constant byte address 0x4 - core index']
  #allocation1 [shape = 'u32[72,128]{1,0:T(1,128)}', space=vmem, size = 0x9000, scoped, tag = 'internal scratch']
  %s0 = inlined_call_operand.vmem [shape: f32[16,8], index: 0, kind: input, shape index: {}]
  %s1 = inlined_call_operand.vmem [shape: f32[8,128], index: 1, kind: input, shape index: {}]
  %s2 = inlined_call_operand.vmem [shape: f32[8,8,128], index: 2, kind: input, shape index: {}]
  %s3 = inlined_call_operand.vmem [shape: f32[1,128], index: 3, kind: input, shape index: {}]
  %s4 = inlined_call_operand.hbm [shape: f32[32,128], index: 4, kind: output, shape index: {}]
  %s5 = sld [smem:[#allocation0]]
  $region49: #{policy_stem_forward.1} parent=0
    _
  %s7 = ssub.s32 1, %s5
  %s8 = scalar_select 0, %s7, %s5
  $region1: #{policy_stem_forward.1} parent=0
    #allocation2 [shape = 'u8[16384]{0}', space=vmem, size = 0x4000, scoped, tag = 'output window, operand 0']
    #allocation3 [shape = 's32[2]{0}', space=sflag, size = 0x8, scoped, tag = 'scoped memory for policy_stem_forward.1']
    %9 = vsyncpa [#allocation3], 0
    %s10 = scalar_lea.sflag [#allocation3], 1
    %11 = vsyncpa %s10, 0
    loop: start=0, step=1, limit=4
    $region2: #{policy_stem_forward.1} parent=1 // loop_pre_header
      _
    $region3: #{policy_stem_forward.1} parent=1 // loop_header
      %s13 = sphi 0, %s17
      %p14 = scmp.ge.s32.totalorder %s13, 4
      %s23 = sphi 0, %s25
      %s26 = sphi 0, %s23
      %s27 = sphi 0, %s26
      %s43 = sphi 0, %s27
      %s47 = sphi 0, %s47
      %s49 = sphi 0, %s47
      %s50 = sphi 0, %s49
      %s64 = sphi 0, %s50
      %s68 = sphi 0, %s68
      %s70 = sphi 0, %s68
      %s71 = sphi 0, %s70
      %s85 = sphi 0, %s71
      %s89 = sphi 0, %s89
      %s91 = sphi 0, %s89
      %s92 = sphi 0, %s91
      %s106 = sphi 0, %s92
      %s112 = sphi 0, %s114
      %s115 = sphi 0, %s112
      %s116 = sphi 0, %s115
      %s132 = sphi 0, %s116
    $region4: #{policy_stem_forward.1} parent=1 // loop_header_branch
      %16 = sbr.rel (%p14) target = $region8
    $region5: #{policy_stem_forward.1} parent=1 // loop_body
      %s18 = ssub.s32 %s13, 1
      %s19 = ssub.s32 %s13, 2
      %s20 = sadd.s32 %s13, 1
      %s21 = ssub.s32 %s13, %s20
      %p22 = scmp.eq.s32.totalorder %s21, 0
      %s24 = sadd.s32 %s23, 1
      %s25 = scalar_select %p22, %s23, %s24
      %p28 = pneg %p22
      %p29 = scmp.eq.s32.totalorder %s13, 1
      %p30 = por %p28, %p29
      %p31 = scmp.ne.s32.totalorder %s23, %s26
      %p32 = scmp.eq.s32.totalorder %s13, 0
      %p33 = por %p31, %p32
      %p34 = scmp.ne.s32.totalorder %s23, %s26
      %p35 = scmp.eq.s32.totalorder %s18, 1
      %p36 = por %p34, %p35
      %p37 = scmp.ne.s32.totalorder %s26, %s27
      %p38 = scmp.eq.s32.totalorder %s18, 0
      %p39 = por %p37, %p38
      %p40 = scmp.ne.s32.totalorder %s26, %s27
      %p41 = scmp.eq.s32.totalorder %s19, 1
      %p42 = por %p40, %p41
      %p44 = scmp.ne.s32.totalorder %s27, %s43
      %p45 = scmp.eq.s32.totalorder %s19, 0
      %p46 = por %p44, %p45
      %s48 = sadd.s32 %s47, 1
      %p51 = scmp.eq.s32.totalorder %s13, 1
      %p52 = scmp.ne.s32.totalorder %s47, %s49
      %p53 = scmp.eq.s32.totalorder %s13, 0
      %p54 = por %p52, %p53
      %p55 = scmp.ne.s32.totalorder %s47, %s49
      %p56 = scmp.eq.s32.totalorder %s18, 1
      %p57 = por %p55, %p56
      %p58 = scmp.ne.s32.totalorder %s49, %s50
      %p59 = scmp.eq.s32.totalorder %s18, 0
      %p60 = por %p58, %p59
      %p61 = scmp.ne.s32.totalorder %s49, %s50
      %p62 = scmp.eq.s32.totalorder %s19, 1
      %p63 = por %p61, %p62
      %p65 = scmp.ne.s32.totalorder %s50, %s64
      %p66 = scmp.eq.s32.totalorder %s19, 0
      %p67 = por %p65, %p66
      %s69 = sadd.s32 %s68, 1
      %p72 = scmp.eq.s32.totalorder %s13, 1
      %p73 = scmp.ne.s32.totalorder %s68, %s70
      %p74 = scmp.eq.s32.totalorder %s13, 0
      %p75 = por %p73, %p74
      %p76 = scmp.ne.s32.totalorder %s68, %s70
      %p77 = scmp.eq.s32.totalorder %s18, 1
      %p78 = por %p76, %p77
      %p79 = scmp.ne.s32.totalorder %s70, %s71
      %p80 = scmp.eq.s32.totalorder %s18, 0
      %p81 = por %p79, %p80
      %p82 = scmp.ne.s32.totalorder %s70, %s71
      %p83 = scmp.eq.s32.totalorder %s19, 1
      %p84 = por %p82, %p83
      %p86 = scmp.ne.s32.totalorder %s71, %s85
      %p87 = scmp.eq.s32.totalorder %s19, 0
      %p88 = por %p86, %p87
      %s90 = sadd.s32 %s89, 1
      %p93 = scmp.eq.s32.totalorder %s13, 1
      %p94 = scmp.ne.s32.totalorder %s89, %s91
      %p95 = scmp.eq.s32.totalorder %s13, 0
      %p96 = por %p94, %p95
      %p97 = scmp.ne.s32.totalorder %s89, %s91
      %p98 = scmp.eq.s32.totalorder %s18, 1
      %p99 = por %p97, %p98
      %p100 = scmp.ne.s32.totalorder %s91, %s92
      %p101 = scmp.eq.s32.totalorder %s18, 0
      %p102 = por %p100, %p101
      %p103 = scmp.ne.s32.totalorder %s91, %s92
      %p104 = scmp.eq.s32.totalorder %s19, 1
      %p105 = por %p103, %p104
      %p107 = scmp.ne.s32.totalorder %s92, %s106
      %p108 = scmp.eq.s32.totalorder %s19, 0
      %p109 = por %p107, %p108
      %s110 = ssub.s32 %s13, %s20
      %p111 = scmp.eq.s32.totalorder %s110, 0
      %s113 = sadd.s32 %s112, 1
      %s114 = scalar_select %p111, %s112, %s113
      %p117 = pneg %p111
      %p118 = scmp.eq.s32.totalorder %s13, 1
      %p119 = por %p117, %p118
      %p120 = scmp.ne.s32.totalorder %s112, %s115
      %p121 = scmp.eq.s32.totalorder %s13, 0
      %p122 = por %p120, %p121
      %p123 = scmp.ne.s32.totalorder %s112, %s115
      %p124 = scmp.eq.s32.totalorder %s18, 1
      %p125 = por %p123, %p124
      %p126 = scmp.ne.s32.totalorder %s115, %s116
      %p127 = scmp.eq.s32.totalorder %s18, 0
      %p128 = por %p126, %p127
      %p129 = scmp.ne.s32.totalorder %s115, %s116
      %p130 = scmp.eq.s32.totalorder %s19, 1
      %p131 = por %p129, %p130
      %p133 = scmp.ne.s32.totalorder %s116, %s132
      %p134 = scmp.eq.s32.totalorder %s19, 0
      %p135 = por %p133, %p134
      %p136 = scmp.le.s32.totalorder 1, %s13
      %p137 = scmp.lt.s32.totalorder %s13, 3
      %p138 = pnand %p136, %p137
      %p139 = pneg %p138
      // Predicated region
      $region9: #{policy_stem_forward.1} parent=5 // pred_check
        _
      $region10: #{policy_stem_forward.1} parent=5 // pred_check_branch
        %141 = sbr.rel (%p138) target = $region12
      $region11: #{policy_stem_forward.1} parent=5 // pred_region
        %s142 = ssub.s32 %s13, 1
        // Predicated region
        $region13: #{policy_stem_forward.1} parent=11 // pred_check
          %p143 = pneg %p60
        $region14: #{policy_stem_forward.1} parent=11 // pred_check_branch
          %145 = sbr.rel (%p143) target = $region16
        $region15: #{policy_stem_forward.1} parent=11 // pred_region
          _
        $region16: #{policy_stem_forward.1} parent=11 // pred_fallthru
          _
        // Predicated region
        $region17: #{policy_stem_forward.1} parent=11 // pred_check
          %p146 = pneg %p81
        $region18: #{policy_stem_forward.1} parent=11 // pred_check_branch
          %148 = sbr.rel (%p146) target = $region20
        $region19: #{policy_stem_forward.1} parent=11 // pred_region
          _
        $region20: #{policy_stem_forward.1} parent=11 // pred_fallthru
          _
        // Predicated region
        $region21: #{policy_stem_forward.1} parent=11 // pred_check
          %p149 = pneg %p102
        $region22: #{policy_stem_forward.1} parent=11 // pred_check_branch
          %151 = sbr.rel (%p149) target = $region24
        $region23: #{policy_stem_forward.1} parent=11 // pred_region
          _
        $region24: #{policy_stem_forward.1} parent=11 // pred_fallthru
          _
      $region12: #{policy_stem_forward.1} parent=5 // pred_fallthru
        _
      %p152 = scmp.lt.s32.totalorder %s13, 2
      // Predicated region
      $region25: #{policy_stem_forward.1} parent=5 // pred_check
        %p153 = pneg %p152
      $region26: #{policy_stem_forward.1} parent=5 // pred_check_branch
        %155 = sbr.rel (%p153) target = $region28
      $region27: #{policy_stem_forward.1} parent=5 // pred_region
        // Predicated region
        $region29: #{policy_stem_forward.1} parent=27 // pred_check
          %p156 = pneg %p33
        $region30: #{policy_stem_forward.1} parent=27 // pred_check_branch
          %158 = sbr.rel (%p156) target = $region32
        $region31: #{policy_stem_forward.1} parent=27 // pred_region
          %p159 = scmp.lt.s32.totalorder %s13, 1
          %s160 = scalar_select %p159, %s13, 1
          %s161 = smul.addr %s160, 8
          %s162 = scalar_lea.vmem %s0, %s161
        $region32: #{policy_stem_forward.1} parent=27 // pred_fallthru
          _
      $region28: #{policy_stem_forward.1} parent=5 // pred_fallthru
        _
      %p163 = scmp.le.s32.totalorder 1, %s13
      %p164 = scmp.lt.s32.totalorder %s13, 3
      %p165 = pnand %p163, %p164
      %p166 = pneg %p165
      // Predicated region
      $region33: #{policy_stem_forward.1} parent=5 // pred_check
        _
      $region34: #{policy_stem_forward.1} parent=5 // pred_check_branch
        %168 = sbr.rel (%p165) target = $region36
      $region35: #{policy_stem_forward.1} parent=5 // pred_region
        %s169 = ssub.s32 %s13, 1
        %p170 = scmp.lt.s32.totalorder %s18, 1
        %s171 = scalar_select %p170, %s18, 1
        %s172 = smul.addr %s171, 8
        %s173 = scalar_lea.vmem %s0, %s172
        %p174 = pneg %p39
        %p175 = pneg %p36
        %p176 = pneg %p60
        %p177 = pneg %p57
        %p178 = pneg %p81
        %p179 = pneg %p78
        %p180 = pneg %p102
        %p181 = pneg %p99
        %p182 = pneg %p128
        %p183 = pneg %p125
        %s184 = sand.u32 %s115, 1
        %s185 = scalar_lea.sflag [#allocation3], %s184
        %s186 = sand.u32 %s115, 1
        %s187 = smul.addr %s186, 16
        %s188 = scalar_lea.vmem [#allocation2], %s187
        %p189 = scmp.lt.s32.totalorder %s18, 1
        %s190 = scalar_select %p189, %s18, 1
        %s191 = smul.addr %s190, 8
        %s192 = scalar_lea.vmem %s0, %s191
        %s193 = smul.u32 2, %s18
        %v194 = vld [vmem:[%s192] sm:$0xff]
        %v195 = vld [vmem:[%s1] sm:$0xff]
        %vm196 = vcmask 64512
        %v198 = vsel %vm196, %v194, 0
        %200 = vmatpush.msra.mxu0 0.0
        %201 = vmatpush.msra.mxu0 0.0
        %202 = vmatpush.msra.mxu0 0.0
        %203 = vmatpush.msra.mxu0 0.0
        %204 = vmatpush.msra.mxu0 0.0
        %205 = vmatpush.msra.mxu0 0.0
        %206 = vmatpush.msra.mxu0 0.0
        %207 = vmatpush.msra.mxu0 0.0
        %208 = vmatpush.msra.mxu0 0.0
        %209 = vmatpush.msra.mxu0 0.0
        %210 = vmatpush.msra.mxu0 0.0
        %211 = vmatpush.msra.mxu0 0.0
        %212 = vmatpush.msra.mxu0 0.0
        %213 = vmatpush.msra.mxu0 0.0
        %214 = vmatpush.msra.mxu0 0.0
        %215 = vmatpush.msra.mxu0 %v195
        %216 = vmatmul.f32.gmra.mxu0 %v198
        %v217 = vpop.f32.mrf.mxu0
        %v218 = vadd.f32 0.0, %v217
        %219 = vdwg.mxu0
        %v220 = vrot.slane %v218, 4
        %v221 = vmax.f32 %v218, %v220
        %v222 = vrot.slane %v221, 2
        %v223 = vmax.f32 %v221, %v222
        %v224 = vrot.slane %v223, 1
        %v225 = vmax.f32 %v223, %v224
        %v226 = vsub.f32 %v218, %v225
        %v227 = vmul.f32 %v226, 1.442695
        %v228 = vpow.pop %v227
        %v229 = vrot.slane %v228, 4
        %v230 = vadd.f32 %v228, %v229
        %v231 = vrot.slane %v230, 2
        %v232 = vadd.f32 %v230, %v231
        %v233 = vrot.slane %v232, 1
        %v234 = vadd.f32 %v232, %v233
        %v235 = vrcp.pop %v234
        %v236 = vmul.f32 %v234, %v235
        %v237 = vsub.f32 1.0, %v236
        %v238 = vmul.f32 %v235, %v237
        %v239 = vadd.f32 %v235, %v238
        %vm240 = vweird.f32 %v234
        %vm241 = vweird.f32 %v235
        %vm242 = vmor %vm240, %vm241
        %v243 = vsel %vm242, %v235, %v239
        %v244 = vand.u32 2147483647, %v234
        %vm245 = vcmp.eq.f32.partialorder %v244, 8.507059e+37
        %v246 = vand.u32 %v234, 2147483648
        %v247 = vor.u32 1.1754944e-38, %v246
        %v248 = vsel %vm245, %v247, %v243
        %v249 = vmul.f32 %v228, %v248
        %v250 = vld [vmem:[%s2] sm:$0xff]
        %251 = vmatpush.msra.mxu0 0.0
        %252 = vmatpush.msra.mxu0 0.0
        %253 = vmatpush.msra.mxu0 0.0
        %254 = vmatpush.msra.mxu0 0.0
        %255 = vmatpush.msra.mxu0 0.0
        %256 = vmatpush.msra.mxu0 0.0
        %257 = vmatpush.msra.mxu0 0.0
        %258 = vmatpush.msra.mxu0 0.0
        %259 = vmatpush.msra.mxu0 0.0
        %260 = vmatpush.msra.mxu0 0.0
        %261 = vmatpush.msra.mxu0 0.0
        %262 = vmatpush.msra.mxu0 0.0
        %263 = vmatpush.msra.mxu0 0.0
        %264 = vmatpush.msra.mxu0 0.0
        %265 = vmatpush.msra.mxu0 0.0
        %266 = vmatpush.msra.mxu0 %v250
        %267 = vmatmul.f32.gmra.mxu0 %v198
        %v268 = vpop.f32.mrf.mxu0
        %v269 = vadd.f32 0.0, %v268
        %270 = vdwg.mxu0
        %271 = vxpose.xlu0.b32.start [1/16] %v249, 128
        %272 = vxpose.xlu0.b32.cont [2/16] 0.0, 128
        %273 = vxpose.xlu0.b32.cont [3/16] 0.0, 128
        %274 = vxpose.xlu0.b32.cont [4/16] 0.0, 128
        %275 = vxpose.xlu0.b32.cont [5/16] 0.0, 128
        %276 = vxpose.xlu0.b32.cont [6/16] 0.0, 128
        %277 = vxpose.xlu0.b32.cont [7/16] 0.0, 128
        %278 = vxpose.xlu0.b32.cont [8/16] 0.0, 128
        %279 = vxpose.xlu0.b32.cont [9/16] 0.0, 128
        %280 = vxpose.xlu0.b32.cont [10/16] 0.0, 128
        %281 = vxpose.xlu0.b32.cont [11/16] 0.0, 128
        %282 = vxpose.xlu0.b32.cont [12/16] 0.0, 128
        %283 = vxpose.xlu0.b32.cont [13/16] 0.0, 128
        %284 = vxpose.xlu0.b32.cont [14/16] 0.0, 128
        %285 = vxpose.xlu0.b32.cont [15/16] 0.0, 128
        %286 = vxpose.xlu0.b32.end [16/16] 0.0, 128
        %v287 = vpop.trf.xlu0
        %v288 = vpop.trf.xlu0
        %v289 = vpop.trf.xlu0
        %v290 = vpop.trf.xlu0
        %v291 = vpop.trf.xlu0
        %v292 = vpop.trf.xlu0
        %v293 = vpop.trf.xlu0
        %v294 = vpop.trf.xlu0
        %v295 = vpop.trf.xlu0
        %v296 = vpop.trf.xlu0
        %v297 = vpop.trf.xlu0
        %v298 = vpop.trf.xlu0
        %v299 = vpop.trf.xlu0
        %v300 = vpop.trf.xlu0
        %v301 = vpop.trf.xlu0
        %v302 = vpop.trf.xlu0
        %s303 = scalar_lea.vmem %s2, 8
        %v304 = vld [vmem:[%s303] sm:$0xff]
        %305 = vmatpush.msra.mxu0 0.0
        %306 = vmatpush.msra.mxu0 0.0
        %307 = vmatpush.msra.mxu0 0.0
        %308 = vmatpush.msra.mxu0 0.0
        %309 = vmatpush.msra.mxu0 0.0
        %310 = vmatpush.msra.mxu0 0.0
        %311 = vmatpush.msra.mxu0 0.0
        %312 = vmatpush.msra.mxu0 0.0
        %313 = vmatpush.msra.mxu0 0.0
        %314 = vmatpush.msra.mxu0 0.0
        %315 = vmatpush.msra.mxu0 0.0
        %316 = vmatpush.msra.mxu0 0.0
        %317 = vmatpush.msra.mxu0 0.0
        %318 = vmatpush.msra.mxu0 0.0
        %319 = vmatpush.msra.mxu0 0.0
        %320 = vmatpush.msra.mxu0 %v304
        %321 = vmatmul.f32.gmra.mxu0 %v198
        %v322 = vpop.f32.mrf.mxu0
        %v323 = vadd.f32 0.0, %v322
        %324 = vdwg.mxu0
        %326 = vrot.lane.b32.xlu0 %v249, 112
        %v327 = vpop.permute.xlu0 %326
        %329 = vxpose.xlu0.b32.start [1/16] %v327, 128
        %330 = vxpose.xlu0.b32.cont [2/16] 0.0, 128
        %331 = vxpose.xlu0.b32.cont [3/16] 0.0, 128
        %332 = vxpose.xlu0.b32.cont [4/16] 0.0, 128
        %333 = vxpose.xlu0.b32.cont [5/16] 0.0, 128
        %334 = vxpose.xlu0.b32.cont [6/16] 0.0, 128
        %335 = vxpose.xlu0.b32.cont [7/16] 0.0, 128
        %336 = vxpose.xlu0.b32.cont [8/16] 0.0, 128
        %337 = vxpose.xlu0.b32.cont [9/16] 0.0, 128
        %338 = vxpose.xlu0.b32.cont [10/16] 0.0, 128
        %339 = vxpose.xlu0.b32.cont [11/16] 0.0, 128
        %340 = vxpose.xlu0.b32.cont [12/16] 0.0, 128
        %341 = vxpose.xlu0.b32.cont [13/16] 0.0, 128
        %342 = vxpose.xlu0.b32.cont [14/16] 0.0, 128
        %343 = vxpose.xlu0.b32.cont [15/16] 0.0, 128
        %344 = vxpose.xlu0.b32.end [16/16] 0.0, 128
        %v345 = vpop.trf.xlu0
        %v346 = vpop.trf.xlu0
        %v347 = vpop.trf.xlu0
        %v348 = vpop.trf.xlu0
        %v349 = vpop.trf.xlu0
        %v350 = vpop.trf.xlu0
        %v351 = vpop.trf.xlu0
        %v352 = vpop.trf.xlu0
        %v353 = vpop.trf.xlu0
        %v354 = vpop.trf.xlu0
        %v355 = vpop.trf.xlu0
        %v356 = vpop.trf.xlu0
        %v357 = vpop.trf.xlu0
        %v358 = vpop.trf.xlu0
        %v359 = vpop.trf.xlu0
        %v360 = vpop.trf.xlu0
        %v362 = vsel %vm196, %v345, 0
        %v365 = vsel %vm196, %v346, 0
        %367 = vmatpush.msra.mxu0 0.0
        %368 = vmatpush.msra.mxu0 0.0
        %369 = vmatpush.msra.mxu0 0.0
        %370 = vmatpush.msra.mxu0 0.0
        %371 = vmatpush.msra.mxu0 0.0
        %372 = vmatpush.msra.mxu0 0.0
        %373 = vmatpush.msra.mxu0 0.0
        %374 = vmatpush.msra.mxu0 0.0
        %375 = vmatpush.msra.mxu0 0.0
        %376 = vmatpush.msra.mxu0 0.0
        %377 = vmatpush.msra.mxu0 0.0
        %378 = vmatpush.msra.mxu0 0.0
        %379 = vmatpush.msra.mxu0 0.0
        %380 = vmatpush.msra.mxu0 0.0
        %381 = vmatpush.msra.mxu0 0.0
        %382 = vmatpush.msra.mxu0 %v323
        %383 = vmatmul.f32.gmra.mxu0 %v362
        %v384 = vpop.f32.mrf.mxu0
        %v385 = vadd.f32 0.0, %v384
        %386 = vmatmul.f32.gmra.mxu0 %v365
        %v387 = vpop.f32.mrf.mxu0
        %v388 = vadd.f32 0.0, %v387
        %389 = vdwg.mxu0
        %v391 = vsel %vm196, %v287, 0
        %v394 = vsel %vm196, %v288, 0
        %396 = vmatpush.msra.mxu0 0.0
        %397 = vmatpush.msra.mxu0 0.0
        %398 = vmatpush.msra.mxu0 0.0
        %399 = vmatpush.msra.mxu0 0.0
        %400 = vmatpush.msra.mxu0 0.0
        %401 = vmatpush.msra.mxu0 0.0
        %402 = vmatpush.msra.mxu0 0.0
        %403 = vmatpush.msra.mxu0 0.0
        %404 = vmatpush.msra.mxu0 0.0
        %405 = vmatpush.msra.mxu0 0.0
        %406 = vmatpush.msra.mxu0 0.0
        %407 = vmatpush.msra.mxu0 0.0
        %408 = vmatpush.msra.mxu0 0.0
        %409 = vmatpush.msra.mxu0 0.0
        %410 = vmatpush.msra.mxu0 0.0
        %411 = vmatpush.msra.mxu0 %v269
        %412 = vmatmul.f32.gmra.mxu0 %v391
        %v413 = vpop.f32.mrf.mxu0
        %v414 = vadd.f32 %v385, %v413
        %415 = vmatmul.f32.gmra.mxu0 %v394
        %v416 = vpop.f32.mrf.mxu0
        %v417 = vadd.f32 %v388, %v416
        %418 = vdwg.mxu0
        %s419 = scalar_lea.vmem %s2, 16
        %v420 = vld [vmem:[%s419] sm:$0xff]
        %421 = vmatpush.msra.mxu0 0.0
        %422 = vmatpush.msra.mxu0 0.0
        %423 = vmatpush.msra.mxu0 0.0
        %424 = vmatpush.msra.mxu0 0.0
        %425 = vmatpush.msra.mxu0 0.0
        %426 = vmatpush.msra.mxu0 0.0
        %427 = vmatpush.msra.mxu0 0.0
        %428 = vmatpush.msra.mxu0 0.0
        %429 = vmatpush.msra.mxu0 0.0
        %430 = vmatpush.msra.mxu0 0.0
        %431 = vmatpush.msra.mxu0 0.0
        %432 = vmatpush.msra.mxu0 0.0
        %433 = vmatpush.msra.mxu0 0.0
        %434 = vmatpush.msra.mxu0 0.0
        %435 = vmatpush.msra.mxu0 0.0
        %436 = vmatpush.msra.mxu0 %v420
        %437 = vmatmul.f32.gmra.mxu0 %v198
        %v438 = vpop.f32.mrf.mxu0
        %v439 = vadd.f32 0.0, %v438
        %440 = vdwg.mxu0
        %441 = vrot.lane.b32.xlu0 %v249, 96
        %v442 = vpop.permute.xlu0 %441
        %444 = vxpose.xlu0.b32.start [1/16] %v442, 128
        %445 = vxpose.xlu0.b32.cont [2/16] 0.0, 128
        %446 = vxpose.xlu0.b32.cont [3/16] 0.0, 128
        %447 = vxpose.xlu0.b32.cont [4/16] 0.0, 128
        %448 = vxpose.xlu0.b32.cont [5/16] 0.0, 128
        %449 = vxpose.xlu0.b32.cont [6/16] 0.0, 128
        %450 = vxpose.xlu0.b32.cont [7/16] 0.0, 128
        %451 = vxpose.xlu0.b32.cont [8/16] 0.0, 128
        %452 = vxpose.xlu0.b32.cont [9/16] 0.0, 128
        %453 = vxpose.xlu0.b32.cont [10/16] 0.0, 128
        %454 = vxpose.xlu0.b32.cont [11/16] 0.0, 128
        %455 = vxpose.xlu0.b32.cont [12/16] 0.0, 128
        %456 = vxpose.xlu0.b32.cont [13/16] 0.0, 128
        %457 = vxpose.xlu0.b32.cont [14/16] 0.0, 128
        %458 = vxpose.xlu0.b32.cont [15/16] 0.0, 128
        %459 = vxpose.xlu0.b32.end [16/16] 0.0, 128
        %v460 = vpop.trf.xlu0
        %v461 = vpop.trf.xlu0
        %v462 = vpop.trf.xlu0
        %v463 = vpop.trf.xlu0
        %v464 = vpop.trf.xlu0
        %v465 = vpop.trf.xlu0
        %v466 = vpop.trf.xlu0
        %v467 = vpop.trf.xlu0
        %v468 = vpop.trf.xlu0
        %v469 = vpop.trf.xlu0
        %v470 = vpop.trf.xlu0
        %v471 = vpop.trf.xlu0
        %v472 = vpop.trf.xlu0
        %v473 = vpop.trf.xlu0
        %v474 = vpop.trf.xlu0
        %v475 = vpop.trf.xlu0
        %v477 = vsel %vm196, %v460, 0
        %v480 = vsel %vm196, %v461, 0
        %482 = vmatpush.msra.mxu0 0.0
        %483 = vmatpush.msra.mxu0 0.0
        %484 = vmatpush.msra.mxu0 0.0
        %485 = vmatpush.msra.mxu0 0.0
        %486 = vmatpush.msra.mxu0 0.0
        %487 = vmatpush.msra.mxu0 0.0
        %488 = vmatpush.msra.mxu0 0.0
        %489 = vmatpush.msra.mxu0 0.0
        %490 = vmatpush.msra.mxu0 0.0
        %491 = vmatpush.msra.mxu0 0.0
        %492 = vmatpush.msra.mxu0 0.0
        %493 = vmatpush.msra.mxu0 0.0
        %494 = vmatpush.msra.mxu0 0.0
        %495 = vmatpush.msra.mxu0 0.0
        %496 = vmatpush.msra.mxu0 0.0
        %497 = vmatpush.msra.mxu0 %v439
        %498 = vmatmul.f32.gmra.mxu0 %v477
        %v499 = vpop.f32.mrf.mxu0
        %v500 = vadd.f32 0.0, %v499
        %501 = vmatmul.f32.gmra.mxu0 %v480
        %v502 = vpop.f32.mrf.mxu0
        %v503 = vadd.f32 0.0, %v502
        %504 = vdwg.mxu0
        %v505 = vadd.f32 %v414, %v500
        %v506 = vadd.f32 %v417, %v503
        %s507 = scalar_lea.vmem %s2, 24
        %v508 = vld [vmem:[%s507] sm:$0xff]
        %509 = vmatpush.msra.mxu0 0.0
        %510 = vmatpush.msra.mxu0 0.0
        %511 = vmatpush.msra.mxu0 0.0
        %512 = vmatpush.msra.mxu0 0.0
        %513 = vmatpush.msra.mxu0 0.0
        %514 = vmatpush.msra.mxu0 0.0
        %515 = vmatpush.msra.mxu0 0.0
        %516 = vmatpush.msra.mxu0 0.0
        %517 = vmatpush.msra.mxu0 0.0
        %518 = vmatpush.msra.mxu0 0.0
        %519 = vmatpush.msra.mxu0 0.0
        %520 = vmatpush.msra.mxu0 0.0
        %521 = vmatpush.msra.mxu0 0.0
        %522 = vmatpush.msra.mxu0 0.0
        %523 = vmatpush.msra.mxu0 0.0
        %524 = vmatpush.msra.mxu0 %v508
        %525 = vmatmul.f32.gmra.mxu0 %v198
        %v526 = vpop.f32.mrf.mxu0
        %v527 = vadd.f32 0.0, %v526
        %528 = vdwg.mxu0
        %529 = vrot.lane.b32.xlu0 %v249, 80
        %v530 = vpop.permute.xlu0 %529
        %532 = vxpose.xlu0.b32.start [1/16] %v530, 128
        %533 = vxpose.xlu0.b32.cont [2/16] 0.0, 128
        %534 = vxpose.xlu0.b32.cont [3/16] 0.0, 128
        %535 = vxpose.xlu0.b32.cont [4/16] 0.0, 128
        %536 = vxpose.xlu0.b32.cont [5/16] 0.0, 128
        %537 = vxpose.xlu0.b32.cont [6/16] 0.0, 128
        %538 = vxpose.xlu0.b32.cont [7/16] 0.0, 128
        %539 = vxpose.xlu0.b32.cont [8/16] 0.0, 128
        %540 = vxpose.xlu0.b32.cont [9/16] 0.0, 128
        %541 = vxpose.xlu0.b32.cont [10/16] 0.0, 128
        %542 = vxpose.xlu0.b32.cont [11/16] 0.0, 128
        %543 = vxpose.xlu0.b32.cont [12/16] 0.0, 128
        %544 = vxpose.xlu0.b32.cont [13/16] 0.0, 128
        %545 = vxpose.xlu0.b32.cont [14/16] 0.0, 128
        %546 = vxpose.xlu0.b32.cont [15/16] 0.0, 128
        %547 = vxpose.xlu0.b32.end [16/16] 0.0, 128
        %v548 = vpop.trf.xlu0
        %v549 = vpop.trf.xlu0
        %v550 = vpop.trf.xlu0
        %v551 = vpop.trf.xlu0
        %v552 = vpop.trf.xlu0
        %v553 = vpop.trf.xlu0
        %v554 = vpop.trf.xlu0
        %v555 = vpop.trf.xlu0
        %v556 = vpop.trf.xlu0
        %v557 = vpop.trf.xlu0
        %v558 = vpop.trf.xlu0
        %v559 = vpop.trf.xlu0
        %v560 = vpop.trf.xlu0
        %v561 = vpop.trf.xlu0
        %v562 = vpop.trf.xlu0
        %v563 = vpop.trf.xlu0
        %v565 = vsel %vm196, %v548, 0
        %v568 = vsel %vm196, %v549, 0
        %570 = vmatpush.msra.mxu0 0.0
        %571 = vmatpush.msra.mxu0 0.0
        %572 = vmatpush.msra.mxu0 0.0
        %573 = vmatpush.msra.mxu0 0.0
        %574 = vmatpush.msra.mxu0 0.0
        %575 = vmatpush.msra.mxu0 0.0
        %576 = vmatpush.msra.mxu0 0.0
        %577 = vmatpush.msra.mxu0 0.0
        %578 = vmatpush.msra.mxu0 0.0
        %579 = vmatpush.msra.mxu0 0.0
        %580 = vmatpush.msra.mxu0 0.0
        %581 = vmatpush.msra.mxu0 0.0
        %582 = vmatpush.msra.mxu0 0.0
        %583 = vmatpush.msra.mxu0 0.0
        %584 = vmatpush.msra.mxu0 0.0
        %585 = vmatpush.msra.mxu0 %v527
        %586 = vmatmul.f32.gmra.mxu0 %v565
        %v587 = vpop.f32.mrf.mxu0
        %v588 = vadd.f32 0.0, %v587
        %589 = vmatmul.f32.gmra.mxu0 %v568
        %v590 = vpop.f32.mrf.mxu0
        %v591 = vadd.f32 0.0, %v590
        %592 = vdwg.mxu0
        %v593 = vadd.f32 %v505, %v588
        %v594 = vadd.f32 %v506, %v591
        %s595 = scalar_lea.vmem %s2, 32
        %v596 = vld [vmem:[%s595] sm:$0xff]
        %597 = vmatpush.msra.mxu0 0.0
        %598 = vmatpush.msra.mxu0 0.0
        %599 = vmatpush.msra.mxu0 0.0
        %600 = vmatpush.msra.mxu0 0.0
        %601 = vmatpush.msra.mxu0 0.0
        %602 = vmatpush.msra.mxu0 0.0
        %603 = vmatpush.msra.mxu0 0.0
        %604 = vmatpush.msra.mxu0 0.0
        %605 = vmatpush.msra.mxu0 0.0
        %606 = vmatpush.msra.mxu0 0.0
        %607 = vmatpush.msra.mxu0 0.0
        %608 = vmatpush.msra.mxu0 0.0
        %609 = vmatpush.msra.mxu0 0.0
        %610 = vmatpush.msra.mxu0 0.0
        %611 = vmatpush.msra.mxu0 0.0
        %612 = vmatpush.msra.mxu0 %v596
        %613 = vmatmul.f32.gmra.mxu0 %v198
        %v614 = vpop.f32.mrf.mxu0
        %v615 = vadd.f32 0.0, %v614
        %616 = vdwg.mxu0
        %617 = vrot.lane.b32.xlu0 %v249, 64
        %v618 = vpop.permute.xlu0 %617
        %620 = vxpose.xlu0.b32.start [1/16] %v618, 128
        %621 = vxpose.xlu0.b32.cont [2/16] 0.0, 128
        %622 = vxpose.xlu0.b32.cont [3/16] 0.0, 128
        %623 = vxpose.xlu0.b32.cont [4/16] 0.0, 128
        %624 = vxpose.xlu0.b32.cont [5/16] 0.0, 128
        %625 = vxpose.xlu0.b32.cont [6/16] 0.0, 128
        %626 = vxpose.xlu0.b32.cont [7/16] 0.0, 128
        %627 = vxpose.xlu0.b32.cont [8/16] 0.0, 128
        %628 = vxpose.xlu0.b32.cont [9/16] 0.0, 128
        %629 = vxpose.xlu0.b32.cont [10/16] 0.0, 128
        %630 = vxpose.xlu0.b32.cont [11/16] 0.0, 128
        %631 = vxpose.xlu0.b32.cont [12/16] 0.0, 128
        %632 = vxpose.xlu0.b32.cont [13/16] 0.0, 128
        %633 = vxpose.xlu0.b32.cont [14/16] 0.0, 128
        %634 = vxpose.xlu0.b32.cont [15/16] 0.0, 128
        %635 = vxpose.xlu0.b32.end [16/16] 0.0, 128
        %v636 = vpop.trf.xlu0
        %v637 = vpop.trf.xlu0
        %v638 = vpop.trf.xlu0
        %v639 = vpop.trf.xlu0
        %v640 = vpop.trf.xlu0
        %v641 = vpop.trf.xlu0
        %v642 = vpop.trf.xlu0
        %v643 = vpop.trf.xlu0
        %v644 = vpop.trf.xlu0
        %v645 = vpop.trf.xlu0
        %v646 = vpop.trf.xlu0
        %v647 = vpop.trf.xlu0
        %v648 = vpop.trf.xlu0
        %v649 = vpop.trf.xlu0
        %v650 = vpop.trf.xlu0
        %v651 = vpop.trf.xlu0
        %v653 = vsel %vm196, %v636, 0
        %v656 = vsel %vm196, %v637, 0
        %658 = vmatpush.msra.mxu0 0.0
        %659 = vmatpush.msra.mxu0 0.0
        %660 = vmatpush.msra.mxu0 0.0
        %661 = vmatpush.msra.mxu0 0.0
        %662 = vmatpush.msra.mxu0 0.0
        %663 = vmatpush.msra.mxu0 0.0
        %664 = vmatpush.msra.mxu0 0.0
        %665 = vmatpush.msra.mxu0 0.0
        %666 = vmatpush.msra.mxu0 0.0
        %667 = vmatpush.msra.mxu0 0.0
        %668 = vmatpush.msra.mxu0 0.0
        %669 = vmatpush.msra.mxu0 0.0
        %670 = vmatpush.msra.mxu0 0.0
        %671 = vmatpush.msra.mxu0 0.0
        %672 = vmatpush.msra.mxu0 0.0
        %673 = vmatpush.msra.mxu0 %v615
        %674 = vmatmul.f32.gmra.mxu0 %v653
        %v675 = vpop.f32.mrf.mxu0
        %v676 = vadd.f32 0.0, %v675
        %677 = vmatmul.f32.gmra.mxu0 %v656
        %v678 = vpop.f32.mrf.mxu0
        %v679 = vadd.f32 0.0, %v678
        %680 = vdwg.mxu0
        %v681 = vadd.f32 %v593, %v676
        %v682 = vadd.f32 %v594, %v679
        %s683 = scalar_lea.vmem %s2, 40
        %v684 = vld [vmem:[%s683] sm:$0xff]
        %685 = vmatpush.msra.mxu0 0.0
        %686 = vmatpush.msra.mxu0 0.0
        %687 = vmatpush.msra.mxu0 0.0
        %688 = vmatpush.msra.mxu0 0.0
        %689 = vmatpush.msra.mxu0 0.0
        %690 = vmatpush.msra.mxu0 0.0
        %691 = vmatpush.msra.mxu0 0.0
        %692 = vmatpush.msra.mxu0 0.0
        %693 = vmatpush.msra.mxu0 0.0
        %694 = vmatpush.msra.mxu0 0.0
        %695 = vmatpush.msra.mxu0 0.0
        %696 = vmatpush.msra.mxu0 0.0
        %697 = vmatpush.msra.mxu0 0.0
        %698 = vmatpush.msra.mxu0 0.0
        %699 = vmatpush.msra.mxu0 0.0
        %700 = vmatpush.msra.mxu0 %v684
        %701 = vmatmul.f32.gmra.mxu0 %v198
        %v702 = vpop.f32.mrf.mxu0
        %v703 = vadd.f32 0.0, %v702
        %704 = vdwg.mxu0
        %705 = vrot.lane.b32.xlu0 %v249, 48
        %v706 = vpop.permute.xlu0 %705
        %708 = vxpose.xlu0.b32.start [1/16] %v706, 128
        %709 = vxpose.xlu0.b32.cont [2/16] 0.0, 128
        %710 = vxpose.xlu0.b32.cont [3/16] 0.0, 128
        %711 = vxpose.xlu0.b32.cont [4/16] 0.0, 128
        %712 = vxpose.xlu0.b32.cont [5/16] 0.0, 128
        %713 = vxpose.xlu0.b32.cont [6/16] 0.0, 128
        %714 = vxpose.xlu0.b32.cont [7/16] 0.0, 128
        %715 = vxpose.xlu0.b32.cont [8/16] 0.0, 128
        %716 = vxpose.xlu0.b32.cont [9/16] 0.0, 128
        %717 = vxpose.xlu0.b32.cont [10/16] 0.0, 128
        %718 = vxpose.xlu0.b32.cont [11/16] 0.0, 128
        %719 = vxpose.xlu0.b32.cont [12/16] 0.0, 128
        %720 = vxpose.xlu0.b32.cont [13/16] 0.0, 128
        %721 = vxpose.xlu0.b32.cont [14/16] 0.0, 128
        %722 = vxpose.xlu0.b32.cont [15/16] 0.0, 128
        %723 = vxpose.xlu0.b32.end [16/16] 0.0, 128
        %v724 = vpop.trf.xlu0
        %v725 = vpop.trf.xlu0
        %v726 = vpop.trf.xlu0
        %v727 = vpop.trf.xlu0
        %v728 = vpop.trf.xlu0
        %v729 = vpop.trf.xlu0
        %v730 = vpop.trf.xlu0
        %v731 = vpop.trf.xlu0
        %v732 = vpop.trf.xlu0
        %v733 = vpop.trf.xlu0
        %v734 = vpop.trf.xlu0
        %v735 = vpop.trf.xlu0
        %v736 = vpop.trf.xlu0
        %v737 = vpop.trf.xlu0
        %v738 = vpop.trf.xlu0
        %v739 = vpop.trf.xlu0
        %v741 = vsel %vm196, %v724, 0
        %v744 = vsel %vm196, %v725, 0
        %746 = vmatpush.msra.mxu0 0.0
        %747 = vmatpush.msra.mxu0 0.0
        %748 = vmatpush.msra.mxu0 0.0
        %749 = vmatpush.msra.mxu0 0.0
        %750 = vmatpush.msra.mxu0 0.0
        %751 = vmatpush.msra.mxu0 0.0
        %752 = vmatpush.msra.mxu0 0.0
        %753 = vmatpush.msra.mxu0 0.0
        %754 = vmatpush.msra.mxu0 0.0
        %755 = vmatpush.msra.mxu0 0.0
        %756 = vmatpush.msra.mxu0 0.0
        %757 = vmatpush.msra.mxu0 0.0
        %758 = vmatpush.msra.mxu0 0.0
        %759 = vmatpush.msra.mxu0 0.0
        %760 = vmatpush.msra.mxu0 0.0
        %761 = vmatpush.msra.mxu0 %v703
        %762 = vmatmul.f32.gmra.mxu0 %v741
        %v763 = vpop.f32.mrf.mxu0
        %v764 = vadd.f32 0.0, %v763
        %765 = vmatmul.f32.gmra.mxu0 %v744
        %v766 = vpop.f32.mrf.mxu0
        %v767 = vadd.f32 0.0, %v766
        %768 = vdwg.mxu0
        %v769 = vadd.f32 %v681, %v764
        %v770 = vadd.f32 %v682, %v767
        %s771 = scalar_lea.vmem %s2, 48
        %v772 = vld [vmem:[%s771] sm:$0xff]
        %773 = vmatpush.msra.mxu0 0.0
        %774 = vmatpush.msra.mxu0 0.0
        %775 = vmatpush.msra.mxu0 0.0
        %776 = vmatpush.msra.mxu0 0.0
        %777 = vmatpush.msra.mxu0 0.0
        %778 = vmatpush.msra.mxu0 0.0
        %779 = vmatpush.msra.mxu0 0.0
        %780 = vmatpush.msra.mxu0 0.0
        %781 = vmatpush.msra.mxu0 0.0
        %782 = vmatpush.msra.mxu0 0.0
        %783 = vmatpush.msra.mxu0 0.0
        %784 = vmatpush.msra.mxu0 0.0
        %785 = vmatpush.msra.mxu0 0.0
        %786 = vmatpush.msra.mxu0 0.0
        %787 = vmatpush.msra.mxu0 0.0
        %788 = vmatpush.msra.mxu0 %v772
        %789 = vmatmul.f32.gmra.mxu0 %v198
        %v790 = vpop.f32.mrf.mxu0
        %v791 = vadd.f32 0.0, %v790
        %792 = vdwg.mxu0
        %793 = vrot.lane.b32.xlu0 %v249, 32
        %v794 = vpop.permute.xlu0 %793
        %796 = vxpose.xlu0.b32.start [1/16] %v794, 128
        %797 = vxpose.xlu0.b32.cont [2/16] 0.0, 128
        %798 = vxpose.xlu0.b32.cont [3/16] 0.0, 128
        %799 = vxpose.xlu0.b32.cont [4/16] 0.0, 128
        %800 = vxpose.xlu0.b32.cont [5/16] 0.0, 128
        %801 = vxpose.xlu0.b32.cont [6/16] 0.0, 128
        %802 = vxpose.xlu0.b32.cont [7/16] 0.0, 128
        %803 = vxpose.xlu0.b32.cont [8/16] 0.0, 128
        %804 = vxpose.xlu0.b32.cont [9/16] 0.0, 128
        %805 = vxpose.xlu0.b32.cont [10/16] 0.0, 128
        %806 = vxpose.xlu0.b32.cont [11/16] 0.0, 128
        %807 = vxpose.xlu0.b32.cont [12/16] 0.0, 128
        %808 = vxpose.xlu0.b32.cont [13/16] 0.0, 128
        %809 = vxpose.xlu0.b32.cont [14/16] 0.0, 128
        %810 = vxpose.xlu0.b32.cont [15/16] 0.0, 128
        %811 = vxpose.xlu0.b32.end [16/16] 0.0, 128
        %v812 = vpop.trf.xlu0
        %v813 = vpop.trf.xlu0
        %v814 = vpop.trf.xlu0
        %v815 = vpop.trf.xlu0
        %v816 = vpop.trf.xlu0
        %v817 = vpop.trf.xlu0
        %v818 = vpop.trf.xlu0
        %v819 = vpop.trf.xlu0
        %v820 = vpop.trf.xlu0
        %v821 = vpop.trf.xlu0
        %v822 = vpop.trf.xlu0
        %v823 = vpop.trf.xlu0
        %v824 = vpop.trf.xlu0
        %v825 = vpop.trf.xlu0
        %v826 = vpop.trf.xlu0
        %v827 = vpop.trf.xlu0
        %v829 = vsel %vm196, %v812, 0
        %v832 = vsel %vm196, %v813, 0
        %834 = vmatpush.msra.mxu0 0.0
        %835 = vmatpush.msra.mxu0 0.0
        %836 = vmatpush.msra.mxu0 0.0
        %837 = vmatpush.msra.mxu0 0.0
        %838 = vmatpush.msra.mxu0 0.0
        %839 = vmatpush.msra.mxu0 0.0
        %840 = vmatpush.msra.mxu0 0.0
        %841 = vmatpush.msra.mxu0 0.0
        %842 = vmatpush.msra.mxu0 0.0
        %843 = vmatpush.msra.mxu0 0.0
        %844 = vmatpush.msra.mxu0 0.0
        %845 = vmatpush.msra.mxu0 0.0
        %846 = vmatpush.msra.mxu0 0.0
        %847 = vmatpush.msra.mxu0 0.0
        %848 = vmatpush.msra.mxu0 0.0
        %849 = vmatpush.msra.mxu0 %v791
        %850 = vmatmul.f32.gmra.mxu0 %v829
        %v851 = vpop.f32.mrf.mxu0
        %v852 = vadd.f32 0.0, %v851
        %853 = vmatmul.f32.gmra.mxu0 %v832
        %v854 = vpop.f32.mrf.mxu0
        %v855 = vadd.f32 0.0, %v854
        %856 = vdwg.mxu0
        %v857 = vadd.f32 %v769, %v852
        %v858 = vadd.f32 %v770, %v855
        %s859 = scalar_lea.vmem %s2, 56
        %v860 = vld [vmem:[%s859] sm:$0xff]
        %861 = vmatpush.msra.mxu0 0.0
        %862 = vmatpush.msra.mxu0 0.0
        %863 = vmatpush.msra.mxu0 0.0
        %864 = vmatpush.msra.mxu0 0.0
        %865 = vmatpush.msra.mxu0 0.0
        %866 = vmatpush.msra.mxu0 0.0
        %867 = vmatpush.msra.mxu0 0.0
        %868 = vmatpush.msra.mxu0 0.0
        %869 = vmatpush.msra.mxu0 0.0
        %870 = vmatpush.msra.mxu0 0.0
        %871 = vmatpush.msra.mxu0 0.0
        %872 = vmatpush.msra.mxu0 0.0
        %873 = vmatpush.msra.mxu0 0.0
        %874 = vmatpush.msra.mxu0 0.0
        %875 = vmatpush.msra.mxu0 0.0
        %876 = vmatpush.msra.mxu0 %v860
        %877 = vmatmul.f32.gmra.mxu0 %v198
        %v878 = vpop.f32.mrf.mxu0
        %v879 = vadd.f32 0.0, %v878
        %880 = vdwg.mxu0
        %881 = vrot.lane.b32.xlu0 %v249, 16
        %v882 = vpop.permute.xlu0 %881
        %884 = vxpose.xlu0.b32.start [1/16] %v882, 128
        %885 = vxpose.xlu0.b32.cont [2/16] 0.0, 128
        %886 = vxpose.xlu0.b32.cont [3/16] 0.0, 128
        %887 = vxpose.xlu0.b32.cont [4/16] 0.0, 128
        %888 = vxpose.xlu0.b32.cont [5/16] 0.0, 128
        %889 = vxpose.xlu0.b32.cont [6/16] 0.0, 128
        %890 = vxpose.xlu0.b32.cont [7/16] 0.0, 128
        %891 = vxpose.xlu0.b32.cont [8/16] 0.0, 128
        %892 = vxpose.xlu0.b32.cont [9/16] 0.0, 128
        %893 = vxpose.xlu0.b32.cont [10/16] 0.0, 128
        %894 = vxpose.xlu0.b32.cont [11/16] 0.0, 128
        %895 = vxpose.xlu0.b32.cont [12/16] 0.0, 128
        %896 = vxpose.xlu0.b32.cont [13/16] 0.0, 128
        %897 = vxpose.xlu0.b32.cont [14/16] 0.0, 128
        %898 = vxpose.xlu0.b32.cont [15/16] 0.0, 128
        %899 = vxpose.xlu0.b32.end [16/16] 0.0, 128
        %v900 = vpop.trf.xlu0
        %v901 = vpop.trf.xlu0
        %v902 = vpop.trf.xlu0
        %v903 = vpop.trf.xlu0
        %v904 = vpop.trf.xlu0
        %v905 = vpop.trf.xlu0
        %v906 = vpop.trf.xlu0
        %v907 = vpop.trf.xlu0
        %v908 = vpop.trf.xlu0
        %v909 = vpop.trf.xlu0
        %v910 = vpop.trf.xlu0
        %v911 = vpop.trf.xlu0
        %v912 = vpop.trf.xlu0
        %v913 = vpop.trf.xlu0
        %v914 = vpop.trf.xlu0
        %v915 = vpop.trf.xlu0
        %v917 = vsel %vm196, %v900, 0
        %v920 = vsel %vm196, %v901, 0
        %922 = vmatpush.msra.mxu0 0.0
        %923 = vmatpush.msra.mxu0 0.0
        %924 = vmatpush.msra.mxu0 0.0
        %925 = vmatpush.msra.mxu0 0.0
        %926 = vmatpush.msra.mxu0 0.0
        %927 = vmatpush.msra.mxu0 0.0
        %928 = vmatpush.msra.mxu0 0.0
        %929 = vmatpush.msra.mxu0 0.0
        %930 = vmatpush.msra.mxu0 0.0
        %931 = vmatpush.msra.mxu0 0.0
        %932 = vmatpush.msra.mxu0 0.0
        %933 = vmatpush.msra.mxu0 0.0
        %934 = vmatpush.msra.mxu0 0.0
        %935 = vmatpush.msra.mxu0 0.0
        %936 = vmatpush.msra.mxu0 0.0
        %937 = vmatpush.msra.mxu0 %v879
        %938 = vmatmul.f32.gmra.mxu0 %v917
        %v939 = vpop.f32.mrf.mxu0
        %v940 = vadd.f32 0.0, %v939
        %941 = vmatmul.f32.gmra.mxu0 %v920
        %v942 = vpop.f32.mrf.mxu0
        %v943 = vadd.f32 0.0, %v942
        %944 = vdwg.mxu0
        %v945 = vadd.f32 %v857, %v940
        %v946 = vadd.f32 %v858, %v943
        %v947 = vld [vmem:[%s3] sm:$0x1]
        %v949 = vperm.slane %v947, 0
        %v951 = vadd.f32 %v945, %v949
        %v952 = vadd.f32 %v946, %v949
        %953 = vst [vmem:[%s188] sm:$0xff] %v951
        %954 = vst [vmem:[%s188 + $0x8] sm:$0xff] %v952
        %s955 = sand.u32 %s115, 1
        %s956 = scalar_lea.sflag [#allocation3], %s955
        %s957 = sand.u32 %s115, 1
        %s958 = smul.addr %s957, 16
        %s959 = scalar_lea.vmem [#allocation2], %s958
        // Predicated region
        $region37: #{policy_stem_forward.1} parent=35 // pred_check
          %p960 = pneg %p125
        $region38: #{policy_stem_forward.1} parent=35 // pred_check_branch
          %962 = sbr.rel (%p960) target = $region40
        $region39: #{policy_stem_forward.1} parent=35 // pred_region
          %s963 = smul.u32 2, %s18
          %965 = vsyncadd %s956, 0
          %s966 = smul.addr %s963, 8
          %s967 = scalar_lea.hbm %s4, %s966
          %s968 = sshll.u32 %s959, 4
          %s969 = int_to_ptr.vmem [resolvable:$true] %s968
          %s970 = sshll.u32 %s967, 4
          %s971 = int_to_ptr.hbm [resolvable:$true] %s970
          %976 = dma.vmem_to_hbm [thread:$0]  %s969, 256, %s971, %s956, 128, 128, 8
        $region40: #{policy_stem_forward.1} parent=35 // pred_fallthru
          _
      $region36: #{policy_stem_forward.1} parent=5 // pred_fallthru
        _
      %p977 = scmp.le.s32.totalorder 2, %s13
      // Predicated region
      $region41: #{policy_stem_forward.1} parent=5 // pred_check
        %p978 = pneg %p977
      $region42: #{policy_stem_forward.1} parent=5 // pred_check_branch
        %980 = sbr.rel (%p978) target = $region44
      $region43: #{policy_stem_forward.1} parent=5 // pred_region
        %s981 = ssub.s32 %s13, 2
        // Predicated region
        $region45: #{policy_stem_forward.1} parent=43 // pred_check
          %p982 = pneg %p131
        $region46: #{policy_stem_forward.1} parent=43 // pred_check_branch
          %984 = sbr.rel (%p982) target = $region48
        $region47: #{policy_stem_forward.1} parent=43 // pred_region
          %s985 = sand.u32 %s116, 1
          %s986 = scalar_lea.sflag [#allocation3], %s985
          %s987 = sand.u32 %s116, 1
          %s988 = smul.addr %s987, 16
          %s989 = scalar_lea.vmem [#allocation2], %s988
          %991 = dma.done %s986, 256
        $region48: #{policy_stem_forward.1} parent=43 // pred_fallthru
          _
      $region44: #{policy_stem_forward.1} parent=5 // pred_fallthru
        _
    $region6: #{policy_stem_forward.1} parent=1 // loop_footer
      %s17 = sadd.s32 1, %s13
    $region7: #{policy_stem_forward.1} parent=1 // loop_footer_branch
      %12 = sbr.rel target = $region3
    $region8: #{policy_stem_forward.1} parent=1 // loop_exit
      _
    %992 = vsyncpa [#allocation3], 1
    %s993 = scalar_lea.sflag [#allocation3], 1
    %994 = vsyncpa %s993, 1

</llo_original>
